<compile_context>
chip_gen: v7x
topology: tpu7x:2x2x1
jax: 0.10.0
libtpu: 0.0.40
codegen_flags: <defaults>
</compile_context>

<pallas_src>
import functools

import jax
import jax.numpy as jnp
from jax.experimental import pallas as pl
from jax.experimental.pallas import tpu as pltpu

_SUBLANE = 8
_TB_MAX = 2048           # fewer ~0.35 µs grid steps; working set << VMEM even at 2048 rows
_MIN_ROWS_PER_TILE = 16  # only split across cores when each tile gets real work


def _round_up(x, m):
    return (x + m - 1) // m * m


def _num_tensorcores():
    """Best-effort TensorCore count per chip (v7x = 2). Falls back to 1."""
    try:
        info = pltpu.get_tpu_info()
        for name in ("num_cores", "num_tensorcores", "tensorcores_per_chip",
                     "cores_per_chip", "num_cores_per_chip"):
            n = getattr(info, name, None)
            if isinstance(n, int) and n >= 1:
                return n
    except Exception:
        pass
    try:
        n = getattr(jax.devices()[0], "num_cores", 1)
        return int(n) if n else 1
    except Exception:
        return 1


def _pick_batch_tile(B, min_tiles=1):
    """Choose (tile_rows, padded_batch, num_tiles).

    - Whole-batch single tile whenever possible (per-step overhead dominates at
      these shapes).
    - At least `min_tiles` tiles (v7x: 2, so both TensorCores get work) once the
      batch is big enough to matter.
    - Batch padded only to a multiple of 8 (sublane), never to a multiple of the
      tile size, so an unlucky B never pads ~2x.
    """
    if B < min_tiles * _MIN_ROWS_PER_TILE:
        min_tiles = 1
    n_tiles = max(min_tiles, pl.cdiv(B, _TB_MAX))
    if n_tiles == 1:
        return B, B, 1
    tb = _round_up(pl.cdiv(B, n_tiles), _SUBLANE)
    return tb, tb * n_tiles, n_tiles


def _cost(rows, D, H, A, x_bytes, w_bytes):
    flops = 2 * rows * (D * H + H * H + H * A)
    bytes_accessed = (x_bytes * rows * D
                      + w_bytes * (D * H + H * H + H * A)
                      + 4 * (2 * H + A)          # biases (f32)
                      + 4 * rows * A)            # f32 output
    return pl.CostEstimate(flops=flops, transcendentals=0,
                           bytes_accessed=bytes_accessed)


# -----------------------------------------------------------------------------
# Kernel: fused 3-layer MLP forward  q = relu(relu(x@W1+b1)@W2+b2)@W3+b3
# Weight refs arrive as the (leading-dim-squeezed) slab of ONE model taken from
# the stacked (2, ...) parameter arrays; x/o are a (TB, D)/(TB, A) batch tile.
# Matmuls accumulate in f32 on the MXU; bias/ReLU are f32 on the VPU.  The
# .astype between layers is a no-op in the default f32 path.
# -----------------------------------------------------------------------------
def _mlp_kernel(x_ref, w1_ref, b1_ref, w2_ref, b2_ref, w3_ref, b3_ref, o_ref):
    h1 = jnp.dot(x_ref[...], w1_ref[...],
                 preferred_element_type=jnp.float32) + b1_ref[...]
    h1 = jnp.maximum(h1, 0.0)
    h2 = jnp.dot(h1.astype(w2_ref.dtype), w2_ref[...],
                 preferred_element_type=jnp.float32) + b2_ref[...]
    h2 = jnp.maximum(h2, 0.0)
    q = jnp.dot(h2.astype(w3_ref.dtype), w3_ref[...],
                preferred_element_type=jnp.float32) + b3_ref[...]
    o_ref[...] = q.astype(o_ref.dtype)


# -----------------------------------------------------------------------------
# Single-model forward.  Params are the STACKED (2, ...) arrays; model_idx
# selects predict (0) or target (1) purely in the BlockSpec index_map so only
# the chosen model's weights are DMA'd (no slicing copy in the wrapper).
# -----------------------------------------------------------------------------
@functools.partial(jax.jit, static_argnames=("model_idx", "min_tiles"))
def mlp_forward(x, w1, b1, w2, b2, w3, b3, *, model_idx=0, min_tiles=1):
    B, D = x.shape
    H = w1.shape[-1]
    A = w3.shape[-1]
    TB, Bp, n_tiles = _pick_batch_tile(B, min_tiles)
    if Bp != B:
        x = jnp.pad(x, ((0, Bp - B), (0, 0)))

    def wspec(arr):
        nd = arr.ndim
        return pl.BlockSpec((None,) + arr.shape[1:],
                            lambda i, _n=nd - 1: (model_idx,) + (0,) * _n)

    out = pl.pallas_call(
        _mlp_kernel,
        out_shape=jax.ShapeDtypeStruct((Bp, A), jnp.float32),
        grid=(n_tiles,),
        in_specs=[
            pl.BlockSpec((TB, D), lambda i: (i, 0)),
            wspec(w1), wspec(b1), wspec(w2), wspec(b2), wspec(w3), wspec(b3),
        ],
        out_specs=pl.BlockSpec((TB, A), lambda i: (i, 0)),
        compiler_params=pltpu.CompilerParams(dimension_semantics=("parallel",)),
        cost_estimate=_cost(Bp, D, H, A, x.dtype.itemsize, w1.dtype.itemsize),
    )(x, w1, b1, w2, b2, w3, b3)
    return out[:B] if Bp != B else out


# -----------------------------------------------------------------------------
# Fused predict+target forward: one pallas_call evaluating both parameter sets.
# x2: (2, B, D) = [predict states, target states]; params already stacked.
# -----------------------------------------------------------------------------
@functools.partial(jax.jit, static_argnames=("min_tiles",))
def mlp_forward_dual(x2, w1, b1, w2, b2, w3, b3, *, min_tiles=1):
    M, B, D = x2.shape
    H = w1.shape[-1]
    A = w3.shape[-1]
    TB, Bp, n_tiles = _pick_batch_tile(B, min_tiles)
    if Bp != B:
        x2 = jnp.pad(x2, ((0, 0), (0, Bp - B), (0, 0)))

    def wspec(arr):
        nd = arr.ndim
        return pl.BlockSpec((None,) + arr.shape[1:],
                            lambda m, i, _n=nd - 1: (m,) + (0,) * _n)

    out = pl.pallas_call(
        _mlp_kernel,
        out_shape=jax.ShapeDtypeStruct((M, Bp, A), jnp.float32),
        grid=(M, n_tiles),
        in_specs=[
            pl.BlockSpec((None, TB, D), lambda m, i: (m, i, 0)),
            wspec(w1), wspec(b1), wspec(w2), wspec(b2), wspec(w3), wspec(b3),
        ],
        out_specs=pl.BlockSpec((None, TB, A), lambda m, i: (m, i, 0)),
        compiler_params=pltpu.CompilerParams(
            dimension_semantics=("parallel", "parallel")),
        cost_estimate=_cost(M * Bp, D, H, A, x2.dtype.itemsize, w1.dtype.itemsize),
    )(x2, w1, b1, w2, b2, w3, b3)
    return out[:, :B] if Bp != B else out


# -----------------------------------------------------------------------------
# Parameter init (deterministic, mimics torch.nn.Linear default init)
# -----------------------------------------------------------------------------
def _linear_params(key, fan_in, fan_out):
    kw, kb = jax.random.split(key)
    bound = 1.0 / jnp.sqrt(float(fan_in))
    w = jax.random.uniform(kw, (fan_in, fan_out), jnp.float32, -bound, bound)
    b = jax.random.uniform(kb, (1, fan_out), jnp.float32, -bound, bound)
    return w, b


def init_baseline_params(key, state_dim, hidden, n_actions):
    k1, k2, k3 = jax.random.split(key, 3)
    w1, b1 = _linear_params(k1, state_dim, hidden)
    w2, b2 = _linear_params(k2, hidden, hidden)
    w3, b3 = _linear_params(k3, hidden, n_actions)
    return {"w1": w1, "b1": b1, "w2": w2, "b2": b2, "w3": w3, "b3": b3}


# -----------------------------------------------------------------------------
# QNetwork wrapper: predict net (index 0) + deepcopy'd target net (index 1),
# stored pre-stacked so the fused dual forward never re-stacks params per step.
# -----------------------------------------------------------------------------
class QNetwork:
    _PREDICT, _TARGET = 0, 1

    def __init__(self, params, tau=0.0, use_bf16=False):
        assert tau < 1, "Must have update on target network"
        self._tau = float(tau)
        self._use_bf16 = bool(use_bf16)
        self._x_dtype = jnp.bfloat16 if use_bf16 else jnp.float32
        wdt = jnp.bfloat16 if use_bf16 else jnp.float32

        def stack(v, dt):
            v = jnp.asarray(v, dt)
            return jnp.stack([v, v], axis=0)   # predict, target (deepcopy at init)

        self._params = {
            "w1": stack(params["w1"], wdt), "b1": stack(params["b1"], jnp.float32),
            "w2": stack(params["w2"], wdt), "b2": stack(params["b2"], jnp.float32),
            "w3": stack(params["w3"], wdt), "b3": stack(params["b3"], jnp.float32),
        }
        # v7x has 2 TensorCores: keep >=2 batch tiles for big batches there.
        self._min_tiles = _num_tensorcores()

    def _convert(self, x):
        x = jnp.asarray(x, dtype=self._x_dtype)
        if x.ndim == 1:
            x = x[None, :]
        return x

    def _args(self):
        p = self._params
        return (p["w1"], p["b1"], p["w2"], p["b2"], p["w3"], p["b3"])

    def forward(self, x, target=False):
        x = self._convert(x)
        return mlp_forward(x, *self._args(),
                           model_idx=self._TARGET if target else self._PREDICT,
                           min_tiles=self._min_tiles)

    __call__ = forward

    def forward_both(self, x_predict, x_target):
        """Q(s) with the predict net and Q(s') with the target net in ONE pallas_call."""
        xp = self._convert(x_predict)
        xt = self._convert(x_target)
        assert xp.shape == xt.shape, "predict/target batches must match for fusion"
        x2 = jnp.stack([xp, xt], axis=0)   # only the states are stacked per call
        out = mlp_forward_dual(x2, *self._args(), min_tiles=self._min_tiles)
        return out[0], out[1]

    def max_value(self, state):
        """Maximum Q-value over all actions for the given state(s)."""
        return jnp.max(self(state, target=False), axis=1)

    def update_target(self):
        # Faithful to the original torch module: target = (1 - tau)*predict + tau*target.
        # (Note: inverse of the usual Polyak convention; with tau=0.0 it is a hard
        # copy, exactly as in the torch code.)
        tau = self._tau
        self._params = {
            k: v.at[self._TARGET].set((1.0 - tau) * v[self._PREDICT]
                                      + tau * v[self._TARGET])
            for k, v in self._params.items()
        }

    # TODO(synk): save/load (.pth file I/O), __getitem__ and max_action
    # (Movement-class python bookkeeping) have no Pallas equivalent.


# -----------------------------------------------------------------------------
if __name__ == "__main__":
    key = jax.random.PRNGKey(0)
    kp, kx, kx2, kbig = jax.random.split(key, 4)

    STATE_DIM = 32   # flat state vector (1-D states get unsqueezed, as in the module)
    HIDDEN = 32
    N_ACTIONS = 4    # Movement action space
    BATCH = 2

    params = init_baseline_params(kp, STATE_DIM, HIDDEN, N_ACTIONS)
    qnet = QNetwork(params, tau=0.0)

    x = jax.random.normal(kx, (BATCH, STATE_DIM), jnp.float32)        # states s
    x_next = jax.random.normal(kx2, (BATCH, STATE_DIM), jnp.float32)  # next states s'

    # Single-model dispatch (predict / target), as in forward(x, target).
    q_pred = qnet(x, target=False)
    q_tgt = qnet(x, target=True)
    # Fused training-step path: Q(s) with predict net + Q(s') with target net.
    q_pred_f, q_tgt_next_f = qnet.forward_both(x, x_next)
    jax.block_until_ready((q_pred, q_tgt, q_pred_f, q_tgt_next_f))

    # Reference in plain JAX.
    def ref(x, p):
        h1 = jnp.maximum(x @ p["w1"] + p["b1"], 0.0)
        h2 = jnp.maximum(h1 @ p["w2"] + p["b2"], 0.0)
        return h2 @ p["w3"] + p["b3"]

    assert q_pred.shape == (BATCH, N_ACTIONS)
    assert jnp.allclose(q_pred, ref(x, params), atol=1e-5)
    # target model is a deepcopy at init -> identical outputs
    assert jnp.allclose(q_pred, q_tgt, atol=1e-6)
    # fused call matches the two separate calls
    assert jnp.allclose(q_pred_f, ref(x, params), atol=1e-5)
    assert jnp.allclose(q_tgt_next_f, ref(x_next, params), atol=1e-5)

    # Larger, non-multiple-of-8 batch -> exercises the tiled / sublane-padded
    # path (and the >=2-tile split when 2 TensorCores are detected).
    xb = jax.random.normal(kbig, (300, STATE_DIM), jnp.float32)
    q_big = qnet(xb, target=False)
    jax.block_until_ready(q_big)
    assert q_big.shape == (300, N_ACTIONS)
    assert jnp.allclose(q_big, ref(xb, params), atol=1e-4)

    # update_target with tau=0.0 is a hard copy (faithful to the torch module).
    qnet.update_target()
    assert jnp.allclose(qnet(x, target=True), ref(x, params), atol=1e-5)

    # max_value reduction (post-kernel max over actions).
    mv = qnet.max_value(x)
    assert mv.shape == (BATCH,)

    # Optional bf16-in-HBM path (halves x/weight DMA bytes; casts happen at
    # init / in the wrapper, not per-layer inside the kernel); loose tolerance.
    qnet_bf16 = QNetwork(params, tau=0.0, use_bf16=True)
    q_bf16 = qnet_bf16(x, target=False)
    jax.block_until_ready(q_bf16)
    assert jnp.allclose(q_bf16, q_pred, atol=0.1, rtol=0.1)

    print("KERNEL_OK")
</pallas_src>

<mosaic_0001>
module attributes {stable_mosaic.version = 11 : i64} {
  func.func @_mlp_kernel(%arg0: i32, %arg1: memref<2x32xf32, #tpu.memory_space<vmem>>, %arg2: memref<1x32x32xf32, #tpu.memory_space<vmem>>, %arg3: memref<1x1x32xf32, #tpu.memory_space<vmem>>, %arg4: memref<1x32x32xf32, #tpu.memory_space<vmem>>, %arg5: memref<1x1x32xf32, #tpu.memory_space<vmem>>, %arg6: memref<1x32x4xf32, #tpu.memory_space<vmem>>, %arg7: memref<1x1x4xf32, #tpu.memory_space<vmem>>, %arg8: memref<2x4xf32, #tpu.memory_space<vmem>>) attributes {dimension_semantics = [#tpu.dimension_semantics<parallel>], iteration_bounds = array<i64: 1>, scalar_prefetch = 0 : i64, scratch_operands = 0 : i64, tpu.core_type = #tpu.core_type<tc>, window_params = [{transform_indices = @transform_0, window_bounds = array<i64: 2, 32>}, {transform_indices = @transform_1, window_bounds = array<i64: 1, 32, 32>}, {transform_indices = @transform_2, window_bounds = array<i64: 1, 1, 32>}, {transform_indices = @transform_3, window_bounds = array<i64: 1, 32, 32>}, {transform_indices = @transform_4, window_bounds = array<i64: 1, 1, 32>}, {transform_indices = @transform_5, window_bounds = array<i64: 1, 32, 4>}, {transform_indices = @transform_6, window_bounds = array<i64: 1, 1, 4>}, {transform_indices = @transform_7, window_bounds = array<i64: 2, 4>}]} {
    %c0 = arith.constant 0 : index
    %c0_0 = arith.constant 0 : index
    %0 = vector.load %arg1[%c0, %c0_0] : memref<2x32xf32, #tpu.memory_space<vmem>>, vector<2x32xf32>
    %c0_1 = arith.constant 0 : index
    %c0_2 = arith.constant 0 : index
    %c0_3 = arith.constant 0 : index
    %1 = vector.load %arg2[%c0_1, %c0_2, %c0_3] : memref<1x32x32xf32, #tpu.memory_space<vmem>>, vector<1x32x32xf32>
    %2 = vector.shape_cast %1 : vector<1x32x32xf32> to vector<32x32xf32>
    %cst = arith.constant dense<0.000000e+00> : vector<2x32xf32>
    %3 = tpu.matmul %0, %2, %cst {dimension_numbers = #tpu.dot_dimension_numbers<[1], [0], [0], [1], [0, 0, 1, 1], [], []>} : vector<2x32xf32>, vector<32x32xf32>, vector<2x32xf32> -> vector<2x32xf32>
    %c0_4 = arith.constant 0 : index
    %c0_5 = arith.constant 0 : index
    %c0_6 = arith.constant 0 : index
    %4 = vector.load %arg3[%c0_4, %c0_5, %c0_6] : memref<1x1x32xf32, #tpu.memory_space<vmem>>, vector<1x1x32xf32>
    %5 = vector.shape_cast %4 : vector<1x1x32xf32> to vector<1x32xf32>
    %6 = vector.broadcast %5 : vector<1x32xf32> to vector<2x32xf32>
    %7 = arith.addf %3, %6 : vector<2x32xf32>
    %cst_7 = arith.constant 0.000000e+00 : f32
    %8 = vector.broadcast %cst_7 : f32 to vector<2x32xf32>
    %9 = arith.maximumf %7, %8 : vector<2x32xf32>
    %c0_8 = arith.constant 0 : index
    %c0_9 = arith.constant 0 : index
    %c0_10 = arith.constant 0 : index
    %10 = vector.load %arg4[%c0_8, %c0_9, %c0_10] : memref<1x32x32xf32, #tpu.memory_space<vmem>>, vector<1x32x32xf32>
    %11 = vector.shape_cast %10 : vector<1x32x32xf32> to vector<32x32xf32>
    %cst_11 = arith.constant dense<0.000000e+00> : vector<2x32xf32>
    %12 = tpu.matmul %9, %11, %cst_11 {dimension_numbers = #tpu.dot_dimension_numbers<[1], [0], [0], [1], [0, 0, 1, 1], [], []>} : vector<2x32xf32>, vector<32x32xf32>, vector<2x32xf32> -> vector<2x32xf32>
    %c0_12 = arith.constant 0 : index
    %c0_13 = arith.constant 0 : index
    %c0_14 = arith.constant 0 : index
    %13 = vector.load %arg5[%c0_12, %c0_13, %c0_14] : memref<1x1x32xf32, #tpu.memory_space<vmem>>, vector<1x1x32xf32>
    %14 = vector.shape_cast %13 : vector<1x1x32xf32> to vector<1x32xf32>
    %15 = vector.broadcast %14 : vector<1x32xf32> to vector<2x32xf32>
    %16 = arith.addf %12, %15 : vector<2x32xf32>
    %cst_15 = arith.constant 0.000000e+00 : f32
    %17 = vector.broadcast %cst_15 : f32 to vector<2x32xf32>
    %18 = arith.maximumf %16, %17 : vector<2x32xf32>
    %c0_16 = arith.constant 0 : index
    %c0_17 = arith.constant 0 : index
    %c0_18 = arith.constant 0 : index
    %19 = vector.load %arg6[%c0_16, %c0_17, %c0_18] : memref<1x32x4xf32, #tpu.memory_space<vmem>>, vector<1x32x4xf32>
    %20 = vector.shape_cast %19 : vector<1x32x4xf32> to vector<32x4xf32>
    %cst_19 = arith.constant dense<0.000000e+00> : vector<2x4xf32>
    %21 = tpu.matmul %18, %20, %cst_19 {dimension_numbers = #tpu.dot_dimension_numbers<[1], [0], [0], [1], [0, 0, 1, 1], [], []>} : vector<2x32xf32>, vector<32x4xf32>, vector<2x4xf32> -> vector<2x4xf32>
    %c0_20 = arith.constant 0 : index
    %c0_21 = arith.constant 0 : index
    %c0_22 = arith.constant 0 : index
    %22 = vector.load %arg7[%c0_20, %c0_21, %c0_22] : memref<1x1x4xf32, #tpu.memory_space<vmem>>, vector<1x1x4xf32>
    %23 = vector.shape_cast %22 : vector<1x1x4xf32> to vector<1x4xf32>
    %24 = vector.broadcast %23 : vector<1x4xf32> to vector<2x4xf32>
    %25 = arith.addf %21, %24 : vector<2x4xf32>
    %c0_23 = arith.constant 0 : index
    %c0_24 = arith.constant 0 : index
    %26 = vector.load %arg8[%c0_23, %c0_24] : memref<2x4xf32, #tpu.memory_space<vmem>>, vector<2x4xf32>
    tpu.vector_store %arg8[%c0_23, %c0_24], %25 {strides = array<i32>} : memref<2x4xf32, #tpu.memory_space<vmem>>, vector<2x4xf32>,
    return
  }
  func.func @transform_0(%arg0: i32) -> (i32, i32) {
    %c0_i32 = arith.constant 0 : i32
    %c0_i32_0 = arith.constant 0 : i32
    return %arg0, %c0_i32 : i32, i32
  }
  func.func @transform_1(%arg0: i32) -> (i32, i32, i32) {
    %c0_i32 = arith.constant 0 : i32
    %c0_i32_0 = arith.constant 0 : i32
    %c0_i32_1 = arith.constant 0 : i32
    %c0_i32_2 = arith.constant 0 : i32
    return %c0_i32, %c0_i32_0, %c0_i32_1 : i32, i32, i32
  }
  func.func @transform_2(%arg0: i32) -> (i32, i32, i32) {
    %c0_i32 = arith.constant 0 : i32
    %c0_i32_0 = arith.constant 0 : i32
    %c0_i32_1 = arith.constant 0 : i32
    %c0_i32_2 = arith.constant 0 : i32
    return %c0_i32, %c0_i32_0, %c0_i32_1 : i32, i32, i32
  }
  func.func @transform_3(%arg0: i32) -> (i32, i32, i32) {
    %c0_i32 = arith.constant 0 : i32
    %c0_i32_0 = arith.constant 0 : i32
    %c0_i32_1 = arith.constant 0 : i32
    %c0_i32_2 = arith.constant 0 : i32
    return %c0_i32, %c0_i32_0, %c0_i32_1 : i32, i32, i32
  }
  func.func @transform_4(%arg0: i32) -> (i32, i32, i32) {
    %c0_i32 = arith.constant 0 : i32
    %c0_i32_0 = arith.constant 0 : i32
    %c0_i32_1 = arith.constant 0 : i32
    %c0_i32_2 = arith.constant 0 : i32
    return %c0_i32, %c0_i32_0, %c0_i32_1 : i32, i32, i32
  }
  func.func @transform_5(%arg0: i32) -> (i32, i32, i32) {
    %c0_i32 = arith.constant 0 : i32
    %c0_i32_0 = arith.constant 0 : i32
    %c0_i32_1 = arith.constant 0 : i32
    %c0_i32_2 = arith.constant 0 : i32
    return %c0_i32, %c0_i32_0, %c0_i32_1 : i32, i32, i32
  }
  func.func @transform_6(%arg0: i32) -> (i32, i32, i32) {
    %c0_i32 = arith.constant 0 : i32
    %c0_i32_0 = arith.constant 0 : i32
    %c0_i32_1 = arith.constant 0 : i32
    %c0_i32_2 = arith.constant 0 : i32
    return %c0_i32, %c0_i32_0, %c0_i32_1 : i32, i32, i32
  }
  func.func @transform_7(%arg0: i32) -> (i32, i32) {
    %c0_i32 = arith.constant 0 : i32
    %c0_i32_0 = arith.constant 0 : i32
    return %arg0, %c0_i32 : i32, i32
  }
}

</mosaic_0001>

<llo_original>
// kernel: mlp_forward.1
$region0: #{mlp_forward.1}
  #allocation0 [shape = 'u32[]', space=smem, size = 0x4, offset = 0x4, fixed_abs, tag = 'smem constant byte address 0x4 - core index']
  #allocation1 [shape = 'u32[144,128]{1,0:T(1,128)}', space=vmem, size = 0x12000, scoped, tag = 'internal scratch']
  %s0 = inlined_call_operand.vmem [shape: f32[2,32], index: 0, kind: input, shape index: {}]
  %s1 = inlined_call_operand.vmem [shape: f32[2,32,32], index: 1, kind: input, shape index: {}]
  %s2 = inlined_call_operand.vmem [shape: f32[2,1,32], index: 2, kind: input, shape index: {}]
  %s3 = inlined_call_operand.hbm [shape: f32[2,32,32], index: 3, kind: input, shape index: {}]
  %s4 = inlined_call_operand.vmem [shape: f32[2,1,32], index: 4, kind: input, shape index: {}]
  %s5 = inlined_call_operand.vmem [shape: f32[2,32,4], index: 5, kind: input, shape index: {}]
  %s6 = inlined_call_operand.vmem [shape: f32[2,1,4], index: 6, kind: input, shape index: {}]
  %s7 = inlined_call_operand.hbm [shape: f32[2,4], index: 7, kind: output, shape index: {}]
  %s8 = sld [smem:[#allocation0]]
  $region42: #{mlp_forward.1} parent=0
    _
  %s10 = ssub.s32 1, %s8
  %s11 = scalar_select 0, %s10, %s8
  $region1: #{mlp_forward.1} parent=0
    #allocation2 [shape = 'u8[16384]{0}', space=vmem, size = 0x4000, scoped, tag = 'input window, operand 3, single buffered']
    #allocation3 [shape = 's32[1]{0}', space=sflag, size = 0x4, scoped, tag = 'scoped memory for mlp_forward.1']
    #allocation4 [shape = 's32[1]{0}', space=sflag, size = 0x4, scoped, tag = 'scoped memory for mlp_forward.1']
    #allocation5 [shape = 'u8[1024]{0}', space=vmem, size = 0x400, scoped, tag = 'output window, operand 0, single buffered']
    %12 = vsyncpa [#allocation3], 0
    %13 = vsyncpa [#allocation4], 0
    // Predicated region
    $region2: #{mlp_forward.1} parent=1 // pred_check
      _
    $region3: #{mlp_forward.1} parent=1 // pred_check_branch
      %15 = sbr.rel (0) target = $region5
    $region4: #{mlp_forward.1} parent=1 // pred_region
      _
    $region5: #{mlp_forward.1} parent=1 // pred_fallthru
      _
    // Predicated region
    $region6: #{mlp_forward.1} parent=1 // pred_check
      _
    $region7: #{mlp_forward.1} parent=1 // pred_check_branch
      %17 = sbr.rel (0) target = $region9
    $region8: #{mlp_forward.1} parent=1 // pred_region
      _
    $region9: #{mlp_forward.1} parent=1 // pred_fallthru
      _
    // Predicated region
    $region10: #{mlp_forward.1} parent=1 // pred_check
      _
    $region11: #{mlp_forward.1} parent=1 // pred_check_branch
      %19 = sbr.rel (0) target = $region13
    $region12: #{mlp_forward.1} parent=1 // pred_region
      _
    $region13: #{mlp_forward.1} parent=1 // pred_fallthru
      _
    // Predicated region
    $region14: #{mlp_forward.1} parent=1 // pred_check
      _
    $region15: #{mlp_forward.1} parent=1 // pred_check_branch
      %21 = sbr.rel (0) target = $region17
    $region16: #{mlp_forward.1} parent=1 // pred_region
      %s23 = ssub.s32 512, 512
      %24 = vsyncadd [#allocation3], %s23
      %s25 = sshll.u32 [#allocation2], 4
      %s26 = int_to_ptr.vmem [resolvable:$true] %s25
      %31 = dma.hbm_to_vmem [thread:$0]  %s3, 512, %s26, [#allocation3], 128, 128, 8
    $region17: #{mlp_forward.1} parent=1 // pred_fallthru
      _
    // Predicated region
    $region18: #{mlp_forward.1} parent=1 // pred_check
      _
    $region19: #{mlp_forward.1} parent=1 // pred_check_branch
      %33 = sbr.rel (0) target = $region21
    $region20: #{mlp_forward.1} parent=1 // pred_region
      _
    $region21: #{mlp_forward.1} parent=1 // pred_fallthru
      _
    // Predicated region
    $region22: #{mlp_forward.1} parent=1 // pred_check
      _
    $region23: #{mlp_forward.1} parent=1 // pred_check_branch
      %35 = sbr.rel (0) target = $region25
    $region24: #{mlp_forward.1} parent=1 // pred_region
      _
    $region25: #{mlp_forward.1} parent=1 // pred_fallthru
      _
    // Predicated region
    $region26: #{mlp_forward.1} parent=1 // pred_check
      _
    $region27: #{mlp_forward.1} parent=1 // pred_check_branch
      %37 = sbr.rel (0) target = $region29
    $region28: #{mlp_forward.1} parent=1 // pred_region
      _
    $region29: #{mlp_forward.1} parent=1 // pred_fallthru
      _
    // Predicated region
    $region30: #{mlp_forward.1} parent=1 // pred_check
      _
    $region31: #{mlp_forward.1} parent=1 // pred_check_branch
      %39 = sbr.rel (0) target = $region33
    $region32: #{mlp_forward.1} parent=1 // pred_region
      %40 = dma.done [#allocation3], 512
    $region33: #{mlp_forward.1} parent=1 // pred_fallthru
      _
    %v41 = vld [vmem:[%s0] sm:$0x3]
    %v42 = vld [vmem:[%s1] sm:$0xff]
    %v43 = vld [vmem:[%s1 + $0x8] sm:$0xff]
    %v44 = vld [vmem:[%s1 + $0x10] sm:$0xff]
    %v45 = vld [vmem:[%s1 + $0x18] sm:$0xff]
    %v46 = vld [vmem:[%s2] sm:$0x1]
    %v48 = vlaneseq
    %v49 = vshrl.u32 %v48, 7
    %v50 = vsub.s32 0, %v49
    %v51 = vrot.slane %v46, %v50
    %vm53 = vcmask 261120
    %v55 = vsel %vm53, %v41, 0
    %57 = vmatprep.subr.mxu0 0.0
    %58 = vmatpush1.msra.mxu0 %v42
    %59 = vmatprep.subr.mxu0 0.0
    %60 = vmatpush1.msra.mxu0 %v43
    %61 = vmatprep.subr.mxu0 0.0
    %62 = vmatpush1.msra.mxu0 %v44
    %63 = vmatprep.subr.mxu0 0.0
    %64 = vmatpush1.msra.mxu0 %v45
    %65 = vmatprep.subr.mxu0 0.0
    %66 = vmatpush1.msra.mxu0 0.0
    %67 = vmatprep.subr.mxu0 0.0
    %68 = vmatpush1.msra.mxu0 0.0
    %69 = vmatprep.subr.mxu0 0.0
    %70 = vmatpush1.msra.mxu0 0.0
    %71 = vmatprep.subr.mxu0 0.0
    %72 = vmatpush1.msra.mxu0 0.0
    %73 = vmatprep.subr.mxu0 0.0
    %74 = vmatpush1.msra.mxu0 0.0
    %75 = vmatprep.subr.mxu0 0.0
    %76 = vmatpush1.msra.mxu0 0.0
    %77 = vmatprep.subr.mxu0 0.0
    %78 = vmatpush1.msra.mxu0 0.0
    %79 = vmatprep.subr.mxu0 0.0
    %80 = vmatpush1.msra.mxu0 0.0
    %81 = vmatprep.subr.mxu0 0.0
    %82 = vmatpush1.msra.mxu0 0.0
    %83 = vmatprep.subr.mxu0 0.0
    %84 = vmatpush1.msra.mxu0 0.0
    %85 = vmatprep.subr.mxu0 0.0
    %86 = vmatpush1.msra.mxu0 0.0
    %87 = vmatprep.subr.mxu0 0.0
    %88 = vmatpush1.msra.mxu0 0.0
    %89 = vmatprep.subr.mxu0 0.0
    %90 = vmatpush1.msra.mxu0 0.0
    %91 = vmatprep.subr.mxu0 0.0
    %92 = vmatpush1.msra.mxu0 0.0
    %93 = vmatprep.subr.mxu0 0.0
    %94 = vmatpush1.msra.mxu0 0.0
    %95 = vmatprep.subr.mxu0 0.0
    %96 = vmatpush1.msra.mxu0 0.0
    %97 = vmatprep.subr.mxu0 0.0
    %98 = vmatpush1.msra.mxu0 0.0
    %99 = vmatprep.subr.mxu0 0.0
    %100 = vmatpush1.msra.mxu0 0.0
    %101 = vmatprep.subr.mxu0 0.0
    %102 = vmatpush1.msra.mxu0 0.0
    %103 = vmatprep.subr.mxu0 0.0
    %104 = vmatpush1.msra.mxu0 0.0
    %105 = vmatprep.subr.mxu0 0.0
    %106 = vmatpush1.msra.mxu0 0.0
    %107 = vmatprep.subr.mxu0 0.0
    %108 = vmatpush1.msra.mxu0 0.0
    %109 = vmatprep.subr.mxu0 0.0
    %110 = vmatpush1.msra.mxu0 0.0
    %111 = vmatprep.subr.mxu0 0.0
    %112 = vmatpush1.msra.mxu0 0.0
    %113 = vmatprep.subr.mxu0 0.0
    %114 = vmatpush1.msra.mxu0 0.0
    %115 = vmatprep.subr.mxu0 0.0
    %116 = vmatpush1.msra.mxu0 0.0
    %117 = vmatprep.subr.mxu0 0.0
    %118 = vmatpush1.msra.mxu0 0.0
    %119 = vmatprep.subr.mxu0 0.0
    %120 = vmatpush1.msra.mxu0 0.0
    %121 = vmatprep.mubr.f32.mxu0 0.0
    %122 = vmatmul.mubr.f32.gmra.mrb[0].mxu0 %v55
    %v123 = vpop.f32.mrb[0].mxu0
    %v124 = vadd.f32 %v51, %v123
    %v125 = vpop.f32.mrb[0].mxu0
    %126 = vdwg.mxu0
    %v127 = vmax.f32 %v124, 0.0
    %v128 = vld [vmem:[#allocation2] sm:$0xff]
    %v129 = vld [vmem:[#allocation2 + $0x8] sm:$0xff]
    %v130 = vld [vmem:[#allocation2 + $0x10] sm:$0xff]
    %v131 = vld [vmem:[#allocation2 + $0x18] sm:$0xff]
    %v132 = vld [vmem:[%s4] sm:$0x1]
    %v134 = vlaneseq
    %v135 = vshrl.u32 %v134, 7
    %v136 = vsub.s32 0, %v135
    %v137 = vrot.slane %v132, %v136
    %v140 = vsel %vm53, %v127, 0
    %142 = vmatprep.subr.mxu0 0.0
    %143 = vmatpush1.msra.mxu0 %v128
    %144 = vmatprep.subr.mxu0 0.0
    %145 = vmatpush1.msra.mxu0 %v129
    %146 = vmatprep.subr.mxu0 0.0
    %147 = vmatpush1.msra.mxu0 %v130
    %148 = vmatprep.subr.mxu0 0.0
    %149 = vmatpush1.msra.mxu0 %v131
    %150 = vmatprep.subr.mxu0 0.0
    %151 = vmatpush1.msra.mxu0 0.0
    %152 = vmatprep.subr.mxu0 0.0
    %153 = vmatpush1.msra.mxu0 0.0
    %154 = vmatprep.subr.mxu0 0.0
    %155 = vmatpush1.msra.mxu0 0.0
    %156 = vmatprep.subr.mxu0 0.0
    %157 = vmatpush1.msra.mxu0 0.0
    %158 = vmatprep.subr.mxu0 0.0
    %159 = vmatpush1.msra.mxu0 0.0
    %160 = vmatprep.subr.mxu0 0.0
    %161 = vmatpush1.msra.mxu0 0.0
    %162 = vmatprep.subr.mxu0 0.0
    %163 = vmatpush1.msra.mxu0 0.0
    %164 = vmatprep.subr.mxu0 0.0
    %165 = vmatpush1.msra.mxu0 0.0
    %166 = vmatprep.subr.mxu0 0.0
    %167 = vmatpush1.msra.mxu0 0.0
    %168 = vmatprep.subr.mxu0 0.0
    %169 = vmatpush1.msra.mxu0 0.0
    %170 = vmatprep.subr.mxu0 0.0
    %171 = vmatpush1.msra.mxu0 0.0
    %172 = vmatprep.subr.mxu0 0.0
    %173 = vmatpush1.msra.mxu0 0.0
    %174 = vmatprep.subr.mxu0 0.0
    %175 = vmatpush1.msra.mxu0 0.0
    %176 = vmatprep.subr.mxu0 0.0
    %177 = vmatpush1.msra.mxu0 0.0
    %178 = vmatprep.subr.mxu0 0.0
    %179 = vmatpush1.msra.mxu0 0.0
    %180 = vmatprep.subr.mxu0 0.0
    %181 = vmatpush1.msra.mxu0 0.0
    %182 = vmatprep.subr.mxu0 0.0
    %183 = vmatpush1.msra.mxu0 0.0
    %184 = vmatprep.subr.mxu0 0.0
    %185 = vmatpush1.msra.mxu0 0.0
    %186 = vmatprep.subr.mxu0 0.0
    %187 = vmatpush1.msra.mxu0 0.0
    %188 = vmatprep.subr.mxu0 0.0
    %189 = vmatpush1.msra.mxu0 0.0
    %190 = vmatprep.subr.mxu0 0.0
    %191 = vmatpush1.msra.mxu0 0.0
    %192 = vmatprep.subr.mxu0 0.0
    %193 = vmatpush1.msra.mxu0 0.0
    %194 = vmatprep.subr.mxu0 0.0
    %195 = vmatpush1.msra.mxu0 0.0
    %196 = vmatprep.subr.mxu0 0.0
    %197 = vmatpush1.msra.mxu0 0.0
    %198 = vmatprep.subr.mxu0 0.0
    %199 = vmatpush1.msra.mxu0 0.0
    %200 = vmatprep.subr.mxu0 0.0
    %201 = vmatpush1.msra.mxu0 0.0
    %202 = vmatprep.subr.mxu0 0.0
    %203 = vmatpush1.msra.mxu0 0.0
    %204 = vmatprep.subr.mxu0 0.0
    %205 = vmatpush1.msra.mxu0 0.0
    %206 = vmatprep.mubr.f32.mxu0 0.0
    %207 = vmatmul.mubr.f32.gmra.mrb[0].mxu0 %v140
    %v208 = vpop.f32.mrb[0].mxu0
    %v209 = vadd.f32 %v137, %v208
    %v210 = vpop.f32.mrb[0].mxu0
    %211 = vdwg.mxu0
    %v212 = vmax.f32 %v209, 0.0
    %v213 = vld [vmem:[%s5] sm:$0xff]
    %v214 = vld [vmem:[%s5 + $0x8] sm:$0xff]
    %v215 = vld [vmem:[%s5 + $0x10] sm:$0xff]
    %v216 = vld [vmem:[%s5 + $0x18] sm:$0xff]
    %v217 = vld [vmem:[%s6] sm:$0x1]
    %v219 = vlaneseq
    %v220 = vshrl.u32 %v219, 7
    %v221 = vsub.s32 0, %v220
    %v222 = vrot.slane %v217, %v221
    %v225 = vsel %vm53, %v212, 0
    %227 = vmatprep.subr.mxu0 0.0
    %228 = vmatpush1.msra.mxu0 %v213
    %229 = vmatprep.subr.mxu0 0.0
    %230 = vmatpush1.msra.mxu0 %v214
    %231 = vmatprep.subr.mxu0 0.0
    %232 = vmatpush1.msra.mxu0 %v215
    %233 = vmatprep.subr.mxu0 0.0
    %234 = vmatpush1.msra.mxu0 %v216
    %235 = vmatprep.subr.mxu0 0.0
    %236 = vmatpush1.msra.mxu0 0.0
    %237 = vmatprep.subr.mxu0 0.0
    %238 = vmatpush1.msra.mxu0 0.0
    %239 = vmatprep.subr.mxu0 0.0
    %240 = vmatpush1.msra.mxu0 0.0
    %241 = vmatprep.subr.mxu0 0.0
    %242 = vmatpush1.msra.mxu0 0.0
    %243 = vmatprep.subr.mxu0 0.0
    %244 = vmatpush1.msra.mxu0 0.0
    %245 = vmatprep.subr.mxu0 0.0
    %246 = vmatpush1.msra.mxu0 0.0
    %247 = vmatprep.subr.mxu0 0.0
    %248 = vmatpush1.msra.mxu0 0.0
    %249 = vmatprep.subr.mxu0 0.0
    %250 = vmatpush1.msra.mxu0 0.0
    %251 = vmatprep.subr.mxu0 0.0
    %252 = vmatpush1.msra.mxu0 0.0
    %253 = vmatprep.subr.mxu0 0.0
    %254 = vmatpush1.msra.mxu0 0.0
    %255 = vmatprep.subr.mxu0 0.0
    %256 = vmatpush1.msra.mxu0 0.0
    %257 = vmatprep.subr.mxu0 0.0
    %258 = vmatpush1.msra.mxu0 0.0
    %259 = vmatprep.subr.mxu0 0.0
    %260 = vmatpush1.msra.mxu0 0.0
    %261 = vmatprep.subr.mxu0 0.0
    %262 = vmatpush1.msra.mxu0 0.0
    %263 = vmatprep.subr.mxu0 0.0
    %264 = vmatpush1.msra.mxu0 0.0
    %265 = vmatprep.subr.mxu0 0.0
    %266 = vmatpush1.msra.mxu0 0.0
    %267 = vmatprep.subr.mxu0 0.0
    %268 = vmatpush1.msra.mxu0 0.0
    %269 = vmatprep.subr.mxu0 0.0
    %270 = vmatpush1.msra.mxu0 0.0
    %271 = vmatprep.subr.mxu0 0.0
    %272 = vmatpush1.msra.mxu0 0.0
    %273 = vmatprep.subr.mxu0 0.0
    %274 = vmatpush1.msra.mxu0 0.0
    %275 = vmatprep.subr.mxu0 0.0
    %276 = vmatpush1.msra.mxu0 0.0
    %277 = vmatprep.subr.mxu0 0.0
    %278 = vmatpush1.msra.mxu0 0.0
    %279 = vmatprep.subr.mxu0 0.0
    %280 = vmatpush1.msra.mxu0 0.0
    %281 = vmatprep.subr.mxu0 0.0
    %282 = vmatpush1.msra.mxu0 0.0
    %283 = vmatprep.subr.mxu0 0.0
    %284 = vmatpush1.msra.mxu0 0.0
    %285 = vmatprep.subr.mxu0 0.0
    %286 = vmatpush1.msra.mxu0 0.0
    %287 = vmatprep.subr.mxu0 0.0
    %288 = vmatpush1.msra.mxu0 0.0
    %289 = vmatprep.subr.mxu0 0.0
    %290 = vmatpush1.msra.mxu0 0.0
    %291 = vmatprep.mubr.f32.mxu0 0.0
    %292 = vmatmul.mubr.f32.gmra.mrb[0].mxu0 %v225
    %v293 = vpop.f32.mrb[0].mxu0
    %v294 = vadd.f32 %v222, %v293
    %v295 = vpop.f32.mrb[0].mxu0
    %296 = vdwg.mxu0
    %vm297 = vcmask 25600
    %298 = vst.msk [vmem:[#allocation5] sm:$0x3] %vm297, %v294
    // Predicated region
    $region34: #{mlp_forward.1} parent=1 // pred_check
      _
    $region35: #{mlp_forward.1} parent=1 // pred_check_branch
      %300 = sbr.rel (0) target = $region37
    $region36: #{mlp_forward.1} parent=1 // pred_region
      %s302 = ssub.s32 32, 32
      %303 = vsyncadd [#allocation4], %s302
      %s305 = sshll.u32 [#allocation5], 4
      %s306 = int_to_ptr.vmem [resolvable:$true] %s305
      %308 = dma.vmem_to_hbm [thread:$0]  %s306, 32, %s7, [#allocation4]
    $region37: #{mlp_forward.1} parent=1 // pred_fallthru
      _
    // Predicated region
    $region38: #{mlp_forward.1} parent=1 // pred_check
      _
    $region39: #{mlp_forward.1} parent=1 // pred_check_branch
      %310 = sbr.rel (0) target = $region41
    $region40: #{mlp_forward.1} parent=1 // pred_region
      %311 = dma.done [#allocation4], 32
    $region41: #{mlp_forward.1} parent=1 // pred_fallthru
      _
    %312 = vsyncpa [#allocation3], 1
    %313 = vsyncpa [#allocation4], 1

</llo_original>
